<compile_context>
chip_gen: v5e
topology: v5e:2x2
jax: 0.10.0
libtpu: 0.0.40
codegen_flags: <defaults>
</compile_context>

<pallas_src>
import functools

import jax
import jax.numpy as jnp
import numpy as np
from jax.experimental import pallas as pl
from jax.experimental.pallas import tpu as pltpu

F_PAD = 128  # lane-dense padded feature width


def _encoder_kernel(a_ref, heat_ref, w_ref, b_ref, gamma_ref, beta_ref,
                    alpha_ref, hout_ref, gh_ref, h_scratch, *, n_nodes):
    l = pl.program_id(0)

    @pl.when(l == 0)
    def _():
        h_scratch[...] = heat_ref[...]
        gh_ref[...] = jnp.zeros_like(gh_ref)

    h = h_scratch[...]

    # GraphConv(norm='both'): aggregate then transform -> (A_hat @ H) @ W + b  (MXU).
    ah = jnp.dot(a_ref[...], h, preferred_element_type=jnp.float32)
    z = jnp.dot(ah, w_ref[0], preferred_element_type=jnp.float32) + b_ref[0]

    # GraphConv's internal activation: PReLU with scalar alpha (SMEM scalar read).
    a_conv = alpha_ref[l, 0]
    z = jnp.where(z >= 0, z, a_conv * z)

    # BatchNorm1d over the node axis: one-pass batch stats (biased var, eps=1e-5).
    inv_n = 1.0 / n_nodes
    s1 = jnp.sum(z, axis=0, keepdims=True)
    s2 = jnp.sum(z * z, axis=0, keepdims=True)
    mean = s1 * inv_n
    var = jnp.maximum(s2 * inv_n - mean * mean, 0.0)
    zn = (z - mean) * jax.lax.rsqrt(var + 1e-5)
    zn = zn * gamma_ref[0] + beta_ref[0]

    # Outer PReLU (self.actions[l]).
    a_act = alpha_ref[l, 1]
    out = jnp.where(zn >= 0, zn, a_act * zn)

    # Carry h to the next layer in VMEM; accumulate SumPooling into resident gh.
    h_scratch[...] = out
    gh_ref[...] += jnp.sum(out, axis=0, keepdims=True)

    # Only the last layer's activations leave the kernel.
    @pl.when(l == pl.num_programs(0) - 1)
    def _():
        hout_ref[...] = out


def _pad2(x, rows, cols):
    out = jnp.zeros((rows, cols), jnp.float32)
    return out.at[:x.shape[0], :x.shape[1]].set(x.astype(jnp.float32))


def encoder1_forward(a_hat, heat, params, out_hidden):
    """Fused Encoder1 forward: returns (h [N, out_hidden], gh [1, out_hidden])."""
    n = heat.shape[0]
    n_layers = len(params)

    # Stack per-layer params, zero-padded to a lane-dense F_PAD feature width.
    w_stack = jnp.stack([_pad2(p["W"], F_PAD, F_PAD) for p in params])            # [L,128,128]
    b_stack = jnp.stack([_pad2(p["b"].reshape(1, -1), 1, F_PAD) for p in params])  # [L,1,128]
    g_stack = jnp.stack([_pad2(p["gamma"].reshape(1, -1), 1, F_PAD) for p in params])
    be_stack = jnp.stack([_pad2(p["beta"].reshape(1, -1), 1, F_PAD) for p in params])
    alpha_stack = jnp.stack(
        [jnp.array([p["alpha_conv"], p["alpha_act"]], jnp.float32) for p in params])  # [L,2]

    heat_p = _pad2(heat, n, F_PAD)

    kernel = functools.partial(_encoder_kernel, n_nodes=n)

    h_pad, gh_pad = pl.pallas_call(
        kernel,
        grid=(n_layers,),
        in_specs=[
            pl.BlockSpec((n, n), lambda l: (0, 0)),                # A_hat (resident)
            pl.BlockSpec((n, F_PAD), lambda l: (0, 0)),            # padded heat (resident)
            pl.BlockSpec((1, F_PAD, F_PAD), lambda l: (l, 0, 0)),  # W[l]
            pl.BlockSpec((1, 1, F_PAD), lambda l: (l, 0, 0)),      # b[l]
            pl.BlockSpec((1, 1, F_PAD), lambda l: (l, 0, 0)),      # gamma[l]
            pl.BlockSpec((1, 1, F_PAD), lambda l: (l, 0, 0)),      # beta[l]
            pl.BlockSpec(memory_space=pltpu.MemorySpace.SMEM),     # PReLU alphas [L,2]
        ],
        out_specs=(
            pl.BlockSpec((n, F_PAD), lambda l: (0, 0)),            # final h
            pl.BlockSpec((1, F_PAD), lambda l: (0, 0)),            # accumulated gh
        ),
        out_shape=(
            jax.ShapeDtypeStruct((n, F_PAD), jnp.float32),
            jax.ShapeDtypeStruct((1, F_PAD), jnp.float32),
        ),
        scratch_shapes=[pltpu.VMEM((n, F_PAD), jnp.float32)],      # running h
        compiler_params=pltpu.CompilerParams(
            dimension_semantics=("arbitrary",)),
    )(a_hat, heat_p, w_stack, b_stack, g_stack, be_stack, alpha_stack)

    return h_pad[:, :out_hidden], gh_pad[:, :out_hidden]


def normalize_adj(adj):
    """DGL GraphConv norm='both' normalization of a dense adjacency (edge j->i in A[i, j])."""
    deg_out = jnp.clip(jnp.sum(adj, axis=0), 1.0, None)  # out-degree of src nodes
    deg_in = jnp.clip(jnp.sum(adj, axis=1), 1.0, None)   # in-degree of dst nodes
    return adj * jax.lax.rsqrt(deg_in)[:, None] * jax.lax.rsqrt(deg_out)[None, :]


def init_encoder1_params(key, in_hidden, out_hidden, n):
    """Deterministic synthetic params mirroring Encoder1.__init__ shapes."""
    params = []
    fin = in_hidden
    for _ in range(n):
        key, wk = jax.random.split(key)
        scale = (6.0 / (fin + out_hidden)) ** 0.5  # xavier-uniform-ish
        w = jax.random.uniform(wk, (fin, out_hidden), jnp.float32, -scale, scale)
        params.append(dict(
            W=w,
            b=jnp.zeros((out_hidden,), jnp.float32),       # GraphConv bias
            gamma=jnp.ones((out_hidden,), jnp.float32),    # BatchNorm weight
            beta=jnp.zeros((out_hidden,), jnp.float32),    # BatchNorm bias
            alpha_conv=0.25,                               # PReLU inside GraphConv
            alpha_act=0.25,                                # PReLU (self.actions[i])
        ))
        fin = out_hidden
    return params


def encoder1_reference(a_hat, heat, params):
    """Pure-JAX reference matching the PyTorch forward semantics."""
    h = heat
    gh = None
    for p in params:
        z = (a_hat @ h) @ p["W"] + p["b"]
        z = jnp.where(z >= 0, z, p["alpha_conv"] * z)
        mean = jnp.mean(z, axis=0, keepdims=True)
        var = jnp.mean((z - mean) ** 2, axis=0, keepdims=True)
        zn = (z - mean) * jax.lax.rsqrt(var + 1e-5)
        zn = zn * p["gamma"] + p["beta"]
        out = jnp.where(zn >= 0, zn, p["alpha_act"] * zn)
        pooled = jnp.sum(out, axis=0, keepdims=True)
        gh = pooled if gh is None else gh + pooled
        h = out
    return h, gh


if __name__ == "__main__":
    N = 16          # number of graph nodes
    IN_HIDDEN = 8
    OUT_HIDDEN = 16
    N_LAYERS = 2

    key = jax.random.PRNGKey(0)
    k_adj, k_feat, k_par = jax.random.split(key, 3)

    # deterministic symmetric adjacency with self-loops (no zero-degree nodes)
    upper = (jax.random.uniform(k_adj, (N, N)) > 0.7).astype(jnp.float32)
    adj = jnp.clip(upper + upper.T, 0.0, 1.0)
    adj = jnp.clip(adj + jnp.eye(N, dtype=jnp.float32), 0.0, 1.0)
    a_hat = normalize_adj(adj)

    heat = jax.random.normal(k_feat, (N, IN_HIDDEN), jnp.float32)
    params = init_encoder1_params(k_par, IN_HIDDEN, OUT_HIDDEN, N_LAYERS)

    h, gh = encoder1_forward(a_hat, heat, params, OUT_HIDDEN)
    jax.block_until_ready((h, gh))

    # correctness check against a pure-JAX reference of the same forward pass
    h_exp, gh_exp = encoder1_reference(a_hat, heat, params)
    np.testing.assert_allclose(np.asarray(h), np.asarray(h_exp), rtol=2e-4, atol=2e-4)
    np.testing.assert_allclose(np.asarray(gh), np.asarray(gh_exp), rtol=2e-4, atol=2e-4)

    assert h.shape == (N, OUT_HIDDEN)
    assert gh.shape == (1, OUT_HIDDEN)
    print("KERNEL_OK")
</pallas_src>

<mosaic_0001>
module attributes {stable_mosaic.version = 11 : i64} {
  func.func @_encoder_kernel(%arg0: i32, %arg1: memref<16x16xf32, #tpu.memory_space<vmem>>, %arg2: memref<16x128xf32, #tpu.memory_space<vmem>>, %arg3: memref<1x128x128xf32, #tpu.memory_space<vmem>>, %arg4: memref<1x1x128xf32, #tpu.memory_space<vmem>>, %arg5: memref<1x1x128xf32, #tpu.memory_space<vmem>>, %arg6: memref<1x1x128xf32, #tpu.memory_space<vmem>>, %arg7: memref<2x2xf32, #tpu.memory_space<smem>>, %arg8: memref<16x128xf32, #tpu.memory_space<vmem>>, %arg9: memref<1x128xf32, #tpu.memory_space<vmem>>, %arg10: memref<16x128xf32, #tpu.memory_space<vmem>>) attributes {dimension_semantics = [#tpu.dimension_semantics<arbitrary>], iteration_bounds = array<i64: 2>, scalar_prefetch = 0 : i64, scratch_operands = 1 : i64, tpu.core_type = #tpu.core_type<tc>, window_params = [{pipeline_mode = #tpu.pipeline_mode<synchronous>, transform_indices = @transform_0, window_bounds = array<i64: 16, 16>}, {pipeline_mode = #tpu.pipeline_mode<synchronous>, transform_indices = @transform_1, window_bounds = array<i64: 16, 128>}, {transform_indices = @transform_2, window_bounds = array<i64: 1, 128, 128>}, {transform_indices = @transform_3, window_bounds = array<i64: 1, 1, 128>}, {transform_indices = @transform_4, window_bounds = array<i64: 1, 1, 128>}, {transform_indices = @transform_5, window_bounds = array<i64: 1, 1, 128>}, {transform_indices = @transform_6, window_bounds = array<i64: 2, 2>}, {pipeline_mode = #tpu.pipeline_mode<synchronous>, transform_indices = @transform_7, window_bounds = array<i64: 16, 128>}, {pipeline_mode = #tpu.pipeline_mode<synchronous>, transform_indices = @transform_8, window_bounds = array<i64: 1, 128>}]} {
    %c0_i32 = arith.constant 0 : i32
    %0 = arith.cmpi eq, %arg0, %c0_i32 : i32
    %1 = arith.extui %0 : i1 to i32
    %c0_i32_0 = arith.constant 0 : i32
    %2 = arith.cmpi ne, %1, %c0_i32_0 : i32
    scf.if %2 {
      %c0_34 = arith.constant 0 : index
      %c0_35 = arith.constant 0 : index
      %64 = vector.load %arg2[%c0_34, %c0_35] : memref<16x128xf32, #tpu.memory_space<vmem>>, vector<16x128xf32>
      %c0_36 = arith.constant 0 : index
      %c0_37 = arith.constant 0 : index
      %65 = vector.load %arg10[%c0_36, %c0_37] : memref<16x128xf32, #tpu.memory_space<vmem>>, vector<16x128xf32>
      tpu.vector_store %arg10[%c0_36, %c0_37], %64 {strides = array<i32>} : memref<16x128xf32, #tpu.memory_space<vmem>>, vector<16x128xf32>,
      %cst_38 = arith.constant 0.000000e+00 : f32
      %66 = vector.broadcast %cst_38 : f32 to vector<1x128xf32>
      %c0_39 = arith.constant 0 : index
      %c0_40 = arith.constant 0 : index
      %67 = vector.load %arg9[%c0_39, %c0_40] : memref<1x128xf32, #tpu.memory_space<vmem>>, vector<1x128xf32>
      tpu.vector_store %arg9[%c0_39, %c0_40], %66 {strides = array<i32>} : memref<1x128xf32, #tpu.memory_space<vmem>>, vector<1x128xf32>,
    } else {
    }
    %c0 = arith.constant 0 : index
    %c0_1 = arith.constant 0 : index
    %3 = vector.load %arg10[%c0, %c0_1] : memref<16x128xf32, #tpu.memory_space<vmem>>, vector<16x128xf32>
    %c0_2 = arith.constant 0 : index
    %c0_3 = arith.constant 0 : index
    %4 = vector.load %arg1[%c0_2, %c0_3] : memref<16x16xf32, #tpu.memory_space<vmem>>, vector<16x16xf32>
    %cst = arith.constant dense<0.000000e+00> : vector<16x128xf32>
    %5 = tpu.matmul %4, %3, %cst {dimension_numbers = #tpu.dot_dimension_numbers<[1], [0], [0], [1], [0, 0, 1, 1], [], []>} : vector<16x16xf32>, vector<16x128xf32>, vector<16x128xf32> -> vector<16x128xf32>
    %c0_4 = arith.constant 0 : index
    %c0_5 = arith.constant 0 : index
    %c0_6 = arith.constant 0 : index
    %6 = vector.load %arg3[%c0_4, %c0_5, %c0_6] : memref<1x128x128xf32, #tpu.memory_space<vmem>>, vector<1x128x128xf32>
    %7 = vector.shape_cast %6 : vector<1x128x128xf32> to vector<128x128xf32>
    %cst_7 = arith.constant dense<0.000000e+00> : vector<16x128xf32>
    %8 = tpu.matmul %5, %7, %cst_7 {dimension_numbers = #tpu.dot_dimension_numbers<[1], [0], [0], [1], [0, 0, 1, 1], [], []>} : vector<16x128xf32>, vector<128x128xf32>, vector<16x128xf32> -> vector<16x128xf32>
    %c0_8 = arith.constant 0 : index
    %c0_9 = arith.constant 0 : index
    %c0_10 = arith.constant 0 : index
    %9 = vector.load %arg4[%c0_8, %c0_9, %c0_10] : memref<1x1x128xf32, #tpu.memory_space<vmem>>, vector<1x1x128xf32>
    %10 = vector.shape_cast %9 : vector<1x1x128xf32> to vector<1x128xf32>
    %11 = vector.broadcast %10 : vector<1x128xf32> to vector<16x128xf32>
    %12 = arith.addf %8, %11 : vector<16x128xf32>
    %13 = arith.index_cast %arg0 : i32 to index
    %c0_11 = arith.constant 0 : index
    %14 = memref.load %arg7[%13, %c0_11] : memref<2x2xf32, #tpu.memory_space<smem>>
    %cst_12 = arith.constant 0.000000e+00 : f32
    %15 = vector.broadcast %cst_12 : f32 to vector<16x128xf32>
    %16 = arith.cmpf oge, %12, %15 : vector<16x128xf32>
    %17 = vector.broadcast %14 : f32 to vector<16x128xf32>
    %18 = arith.mulf %17, %12 : vector<16x128xf32>
    %19 = arith.select %16, %12, %18 : vector<16x128xi1>, vector<16x128xf32>
    %cst_13 = arith.constant dense<0.000000e+00> : vector<128xf32>
    %20 = vector.multi_reduction <add>, %19, %cst_13 [0] : vector<16x128xf32> to vector<128xf32>
    %21 = vector.shape_cast %20 : vector<128xf32> to vector<1x128xf32>
    %22 = arith.mulf %19, %19 : vector<16x128xf32>
    %cst_14 = arith.constant dense<0.000000e+00> : vector<128xf32>
    %23 = vector.multi_reduction <add>, %22, %cst_14 [0] : vector<16x128xf32> to vector<128xf32>
    %24 = vector.shape_cast %23 : vector<128xf32> to vector<1x128xf32>
    %cst_15 = arith.constant 6.250000e-02 : f32
    %25 = vector.broadcast %cst_15 : f32 to vector<1x128xf32>
    %26 = arith.mulf %21, %25 : vector<1x128xf32>
    %cst_16 = arith.constant 6.250000e-02 : f32
    %27 = vector.broadcast %cst_16 : f32 to vector<1x128xf32>
    %28 = arith.mulf %24, %27 : vector<1x128xf32>
    %29 = arith.mulf %26, %26 : vector<1x128xf32>
    %30 = arith.subf %28, %29 : vector<1x128xf32>
    %cst_17 = arith.constant 0.000000e+00 : f32
    %31 = vector.broadcast %cst_17 : f32 to vector<1x128xf32>
    %32 = arith.maximumf %30, %31 : vector<1x128xf32>
    %33 = vector.broadcast %26 : vector<1x128xf32> to vector<16x128xf32>
    %34 = arith.subf %19, %33 : vector<16x128xf32>
    %cst_18 = arith.constant 9.99999974E-6 : f32
    %35 = vector.broadcast %cst_18 : f32 to vector<1x128xf32>
    %36 = arith.addf %32, %35 : vector<1x128xf32>
    %37 = math.rsqrt %36 : vector<1x128xf32>
    %38 = vector.broadcast %37 : vector<1x128xf32> to vector<16x128xf32>
    %39 = arith.mulf %34, %38 : vector<16x128xf32>
    %c0_19 = arith.constant 0 : index
    %c0_20 = arith.constant 0 : index
    %c0_21 = arith.constant 0 : index
    %40 = vector.load %arg5[%c0_19, %c0_20, %c0_21] : memref<1x1x128xf32, #tpu.memory_space<vmem>>, vector<1x1x128xf32>
    %41 = vector.shape_cast %40 : vector<1x1x128xf32> to vector<1x128xf32>
    %42 = vector.broadcast %41 : vector<1x128xf32> to vector<16x128xf32>
    %43 = arith.mulf %39, %42 : vector<16x128xf32>
    %c0_22 = arith.constant 0 : index
    %c0_23 = arith.constant 0 : index
    %c0_24 = arith.constant 0 : index
    %44 = vector.load %arg6[%c0_22, %c0_23, %c0_24] : memref<1x1x128xf32, #tpu.memory_space<vmem>>, vector<1x1x128xf32>
    %45 = vector.shape_cast %44 : vector<1x1x128xf32> to vector<1x128xf32>
    %46 = vector.broadcast %45 : vector<1x128xf32> to vector<16x128xf32>
    %47 = arith.addf %43, %46 : vector<16x128xf32>
    %48 = arith.index_cast %arg0 : i32 to index
    %c1 = arith.constant 1 : index
    %49 = memref.load %arg7[%48, %c1] : memref<2x2xf32, #tpu.memory_space<smem>>
    %cst_25 = arith.constant 0.000000e+00 : f32
    %50 = vector.broadcast %cst_25 : f32 to vector<16x128xf32>
    %51 = arith.cmpf oge, %47, %50 : vector<16x128xf32>
    %52 = vector.broadcast %49 : f32 to vector<16x128xf32>
    %53 = arith.mulf %52, %47 : vector<16x128xf32>
    %54 = arith.select %51, %47, %53 : vector<16x128xi1>, vector<16x128xf32>
    %c0_26 = arith.constant 0 : index
    %c0_27 = arith.constant 0 : index
    %55 = vector.load %arg10[%c0_26, %c0_27] : memref<16x128xf32, #tpu.memory_space<vmem>>, vector<16x128xf32>
    tpu.vector_store %arg10[%c0_26, %c0_27], %54 {strides = array<i32>} : memref<16x128xf32, #tpu.memory_space<vmem>>, vector<16x128xf32>,
    %c0_28 = arith.constant 0 : index
    %c0_29 = arith.constant 0 : index
    %56 = vector.load %arg9[%c0_28, %c0_29] : memref<1x128xf32, #tpu.memory_space<vmem>>, vector<1x128xf32>
    %cst_30 = arith.constant dense<0.000000e+00> : vector<128xf32>
    %57 = vector.multi_reduction <add>, %54, %cst_30 [0] : vector<16x128xf32> to vector<128xf32>
    %58 = vector.shape_cast %57 : vector<128xf32> to vector<1x128xf32>
    %59 = arith.addf %56, %58 : vector<1x128xf32>
    %c0_31 = arith.constant 0 : index
    %c0_32 = arith.constant 0 : index
    %60 = vector.load %arg9[%c0_31, %c0_32] : memref<1x128xf32, #tpu.memory_space<vmem>>, vector<1x128xf32>
    tpu.vector_store %arg9[%c0_31, %c0_32], %59 {strides = array<i32>} : memref<1x128xf32, #tpu.memory_space<vmem>>, vector<1x128xf32>,
    %c1_i32 = arith.constant 1 : i32
    %61 = arith.cmpi eq, %arg0, %c1_i32 : i32
    %62 = arith.extui %61 : i1 to i32
    %c0_i32_33 = arith.constant 0 : i32
    %63 = arith.cmpi ne, %62, %c0_i32_33 : i32
    scf.if %63 {
      %c0_34 = arith.constant 0 : index
      %c0_35 = arith.constant 0 : index
      %64 = vector.load %arg8[%c0_34, %c0_35] : memref<16x128xf32, #tpu.memory_space<vmem>>, vector<16x128xf32>
      tpu.vector_store %arg8[%c0_34, %c0_35], %54 {strides = array<i32>} : memref<16x128xf32, #tpu.memory_space<vmem>>, vector<16x128xf32>,
    } else {
    }
    return
  }
  func.func @transform_0(%arg0: i32) -> (i32, i32) {
    %c0_i32 = arith.constant 0 : i32
    %c0_i32_0 = arith.constant 0 : i32
    %c0_i32_1 = arith.constant 0 : i32
    return %c0_i32, %c0_i32_0 : i32, i32
  }
  func.func @transform_1(%arg0: i32) -> (i32, i32) {
    %c0_i32 = arith.constant 0 : i32
    %c0_i32_0 = arith.constant 0 : i32
    %c0_i32_1 = arith.constant 0 : i32
    return %c0_i32, %c0_i32_0 : i32, i32
  }
  func.func @transform_2(%arg0: i32) -> (i32, i32, i32) {
    %c0_i32 = arith.constant 0 : i32
    %c0_i32_0 = arith.constant 0 : i32
    %c0_i32_1 = arith.constant 0 : i32
    return %arg0, %c0_i32, %c0_i32_0 : i32, i32, i32
  }
  func.func @transform_3(%arg0: i32) -> (i32, i32, i32) {
    %c0_i32 = arith.constant 0 : i32
    %c0_i32_0 = arith.constant 0 : i32
    %c0_i32_1 = arith.constant 0 : i32
    return %arg0, %c0_i32, %c0_i32_0 : i32, i32, i32
  }
  func.func @transform_4(%arg0: i32) -> (i32, i32, i32) {
    %c0_i32 = arith.constant 0 : i32
    %c0_i32_0 = arith.constant 0 : i32
    %c0_i32_1 = arith.constant 0 : i32
    return %arg0, %c0_i32, %c0_i32_0 : i32, i32, i32
  }
  func.func @transform_5(%arg0: i32) -> (i32, i32, i32) {
    %c0_i32 = arith.constant 0 : i32
    %c0_i32_0 = arith.constant 0 : i32
    %c0_i32_1 = arith.constant 0 : i32
    return %arg0, %c0_i32, %c0_i32_0 : i32, i32, i32
  }
  func.func @transform_6(%arg0: i32) -> (i32, i32) {
    %c0_i32 = arith.constant 0 : i32
    %c0_i32_0 = arith.constant 0 : i32
    %c0_i32_1 = arith.constant 0 : i32
    return %c0_i32, %c0_i32_0 : i32, i32
  }
  func.func @transform_7(%arg0: i32) -> (i32, i32) {
    %c0_i32 = arith.constant 0 : i32
    %c0_i32_0 = arith.constant 0 : i32
    %c0_i32_1 = arith.constant 0 : i32
    return %c0_i32, %c0_i32_0 : i32, i32
  }
  func.func @transform_8(%arg0: i32) -> (i32, i32) {
    %c0_i32 = arith.constant 0 : i32
    %c0_i32_0 = arith.constant 0 : i32
    %c0_i32_1 = arith.constant 0 : i32
    return %c0_i32, %c0_i32_0 : i32, i32
  }
}

</mosaic_0001>

<llo_original>
// kernel: tpu_custom_call.1
$region0: #{tpu_custom_call.1}
  #allocation0 [shape = 'u32[]', space=smem, size = 0x4, offset = 0x4, fixed_abs, tag = 'smem constant byte address 0x4 - core index']
  #allocation1 [shape = 'u32[72,128]{1,0:T(1,128)}', space=vmem, size = 0x9000, scoped, tag = 'internal scratch']
  #allocation2 [shape = 'f32[16,128]{1,0:T(8,128)}', space=vmem, size = 0x2000, scoped, tag = 'scratch operand']
  %s0 = inlined_call_operand.hbm [shape: f32[16,16], index: 0, kind: input, shape index: {}]
  %s1 = inlined_call_operand.hbm [shape: f32[16,128], index: 1, kind: input, shape index: {}]
  %s2 = inlined_call_operand.hbm [shape: f32[2,128,128], index: 2, kind: input, shape index: {}]
  %s3 = inlined_call_operand.vmem [shape: f32[2,1,128], index: 3, kind: input, shape index: {}]
  %s4 = inlined_call_operand.hbm [shape: f32[2,1,128], index: 4, kind: input, shape index: {}]
  %s5 = inlined_call_operand.vmem [shape: f32[2,1,128], index: 5, kind: input, shape index: {}]
  %s6 = inlined_call_operand.hbm [shape: f32[2,2], index: 6, kind: input, shape index: {}]
  %s7 = inlined_call_operand.hbm [shape: f32[16,128], index: 7, kind: output, shape index: {0}]
  %s8 = inlined_call_operand.hbm [shape: f32[1,128], index: 8, kind: output, shape index: {1}]
  %9 = xla_tuple %s7, %s8
  %s10 = sld [smem:[#allocation0]]
  $region97: #{tpu_custom_call.1} parent=0
    _
  %s12 = ssub.s32 1, %s10
  %s13 = scalar_select 0, %s12, %s10
  $region1: #{tpu_custom_call.1} parent=0
    #allocation3 [shape = 'u8[8192]{0}', space=vmem, size = 0x2000, scoped, tag = 'input window, operand 0, single buffered']
    #allocation4 [shape = 's32[2]{0}', space=sflag, size = 0x8, scoped, tag = 'scoped memory for tpu_custom_call.1']
    #allocation5 [shape = 's32[2]{0}', space=sflag, size = 0x8, scoped, tag = 'scoped memory for tpu_custom_call.1']
    #allocation6 [shape = 's32[2]{0}', space=sflag, size = 0x8, scoped, tag = 'scoped memory for tpu_custom_call.1']
    #allocation7 [shape = 'u8[8192]{0}', space=vmem, size = 0x2000, scoped, tag = 'input window, operand 1, single buffered']
    #allocation8 [shape = 's32[1]{0}', space=sflag, size = 0x4, scoped, tag = 'scoped memory for tpu_custom_call.1']
    #allocation9 [shape = 'u8[131072]{0}', space=vmem, size = 0x20000, scoped, tag = 'input window, operand 2']
    #allocation10 [shape = 'u8[1024]{0}', space=vmem, size = 0x400, scoped, tag = 'input window, operand 4']
    #allocation11 [shape = 'u8[1024]{0}', space=smem, size = 0x400, scoped, tag = 'input window, operand 6, single buffered']
    #allocation12 [shape = 'u8[8192]{0}', space=vmem, size = 0x2000, scoped, tag = 'output window, operand 0, single buffered']
    #allocation13 [shape = 'u8[512]{0}', space=vmem, size = 0x400, scoped, tag = 'output window, operand 1, single buffered']
    #allocation14 [shape = 's32[1]{0}', space=sflag, size = 0x4, scoped, tag = 'scoped memory for tpu_custom_call.1']
    %14 = vsyncpa [#allocation4], 0
    %15 = vsyncpa [#allocation8], 0
    %16 = vsyncpa [#allocation6], 0
    %17 = vsyncpa [#allocation5], 0
    %18 = vsyncpa [#allocation14], 0
    loop: start=0, step=1, limit=4
    $region2: #{tpu_custom_call.1} parent=1 // loop_pre_header
      _
    $region3: #{tpu_custom_call.1} parent=1 // loop_header
      %s20 = sphi 0, %s24
      %p21 = scmp.ge.s32.totalorder %s20, 4
      %s28 = sphi 0, %s28
      %s30 = sphi 0, %s28
      %s31 = sphi 0, %s30
      %s45 = sphi 0, %s31
      %s49 = sphi 0, %s49
      %s51 = sphi 0, %s49
      %s52 = sphi 0, %s51
      %s66 = sphi 0, %s52
      %s72 = sphi 0, %s74
      %s75 = sphi 0, %s72
      %s76 = sphi 0, %s75
      %s92 = sphi 0, %s76
      %s98 = sphi 0, %s100
      %s101 = sphi 0, %s98
      %s102 = sphi 0, %s101
      %s118 = sphi 0, %s102
      %s124 = sphi 0, %s126
      %s127 = sphi 0, %s124
      %s128 = sphi 0, %s127
      %s144 = sphi 0, %s128
      %s150 = sphi 0, %s152
      %s153 = sphi 0, %s150
      %s154 = sphi 0, %s153
      %s170 = sphi 0, %s154
      %s174 = sphi 0, %s174
      %s176 = sphi 0, %s174
      %s177 = sphi 0, %s176
      %s191 = sphi 0, %s177
      %s195 = sphi 0, %s195
      %s197 = sphi 0, %s195
      %s198 = sphi 0, %s197
      %s212 = sphi 0, %s198
      %s216 = sphi 0, %s216
      %s218 = sphi 0, %s216
      %s219 = sphi 0, %s218
      %s233 = sphi 0, %s219
    $region4: #{tpu_custom_call.1} parent=1 // loop_header_branch
      %23 = sbr.rel (%p21) target = $region8
    $region5: #{tpu_custom_call.1} parent=1 // loop_body
      %s25 = ssub.s32 %s20, 1
      %s26 = ssub.s32 %s20, 2
      %s27 = sadd.s32 %s20, 1
      %s29 = sadd.s32 %s28, 1
      %p32 = scmp.eq.s32.totalorder %s20, 1
      %p33 = scmp.ne.s32.totalorder %s28, %s30
      %p34 = scmp.eq.s32.totalorder %s20, 0
      %p35 = por %p33, %p34
      %p36 = scmp.ne.s32.totalorder %s28, %s30
      %p37 = scmp.eq.s32.totalorder %s25, 1
      %p38 = por %p36, %p37
      %p39 = scmp.ne.s32.totalorder %s30, %s31
      %p40 = scmp.eq.s32.totalorder %s25, 0
      %p41 = por %p39, %p40
      %p42 = scmp.ne.s32.totalorder %s30, %s31
      %p43 = scmp.eq.s32.totalorder %s26, 1
      %p44 = por %p42, %p43
      %p46 = scmp.ne.s32.totalorder %s31, %s45
      %p47 = scmp.eq.s32.totalorder %s26, 0
      %p48 = por %p46, %p47
      %s50 = sadd.s32 %s49, 1
      %p53 = scmp.eq.s32.totalorder %s20, 1
      %p54 = scmp.ne.s32.totalorder %s49, %s51
      %p55 = scmp.eq.s32.totalorder %s20, 0
      %p56 = por %p54, %p55
      %p57 = scmp.ne.s32.totalorder %s49, %s51
      %p58 = scmp.eq.s32.totalorder %s25, 1
      %p59 = por %p57, %p58
      %p60 = scmp.ne.s32.totalorder %s51, %s52
      %p61 = scmp.eq.s32.totalorder %s25, 0
      %p62 = por %p60, %p61
      %p63 = scmp.ne.s32.totalorder %s51, %s52
      %p64 = scmp.eq.s32.totalorder %s26, 1
      %p65 = por %p63, %p64
      %p67 = scmp.ne.s32.totalorder %s52, %s66
      %p68 = scmp.eq.s32.totalorder %s26, 0
      %p69 = por %p67, %p68
      %s70 = ssub.s32 %s20, %s27
      %p71 = scmp.eq.s32.totalorder %s70, 0
      %s73 = sadd.s32 %s72, 1
      %s74 = scalar_select %p71, %s72, %s73
      %p77 = pneg %p71
      %p78 = scmp.eq.s32.totalorder %s20, 1
      %p79 = por %p77, %p78
      %p80 = scmp.ne.s32.totalorder %s72, %s75
      %p81 = scmp.eq.s32.totalorder %s20, 0
      %p82 = por %p80, %p81
      %p83 = scmp.ne.s32.totalorder %s72, %s75
      %p84 = scmp.eq.s32.totalorder %s25, 1
      %p85 = por %p83, %p84
      %p86 = scmp.ne.s32.totalorder %s75, %s76
      %p87 = scmp.eq.s32.totalorder %s25, 0
      %p88 = por %p86, %p87
      %p89 = scmp.ne.s32.totalorder %s75, %s76
      %p90 = scmp.eq.s32.totalorder %s26, 1
      %p91 = por %p89, %p90
      %p93 = scmp.ne.s32.totalorder %s76, %s92
      %p94 = scmp.eq.s32.totalorder %s26, 0
      %p95 = por %p93, %p94
      %s96 = ssub.s32 %s20, %s27
      %p97 = scmp.eq.s32.totalorder %s96, 0
      %s99 = sadd.s32 %s98, 1
      %s100 = scalar_select %p97, %s98, %s99
      %p103 = pneg %p97
      %p104 = scmp.eq.s32.totalorder %s20, 1
      %p105 = por %p103, %p104
      %p106 = scmp.ne.s32.totalorder %s98, %s101
      %p107 = scmp.eq.s32.totalorder %s20, 0
      %p108 = por %p106, %p107
      %p109 = scmp.ne.s32.totalorder %s98, %s101
      %p110 = scmp.eq.s32.totalorder %s25, 1
      %p111 = por %p109, %p110
      %p112 = scmp.ne.s32.totalorder %s101, %s102
      %p113 = scmp.eq.s32.totalorder %s25, 0
      %p114 = por %p112, %p113
      %p115 = scmp.ne.s32.totalorder %s101, %s102
      %p116 = scmp.eq.s32.totalorder %s26, 1
      %p117 = por %p115, %p116
      %p119 = scmp.ne.s32.totalorder %s102, %s118
      %p120 = scmp.eq.s32.totalorder %s26, 0
      %p121 = por %p119, %p120
      %s122 = ssub.s32 %s20, %s27
      %p123 = scmp.eq.s32.totalorder %s122, 0
      %s125 = sadd.s32 %s124, 1
      %s126 = scalar_select %p123, %s124, %s125
      %p129 = pneg %p123
      %p130 = scmp.eq.s32.totalorder %s20, 1
      %p131 = por %p129, %p130
      %p132 = scmp.ne.s32.totalorder %s124, %s127
      %p133 = scmp.eq.s32.totalorder %s20, 0
      %p134 = por %p132, %p133
      %p135 = scmp.ne.s32.totalorder %s124, %s127
      %p136 = scmp.eq.s32.totalorder %s25, 1
      %p137 = por %p135, %p136
      %p138 = scmp.ne.s32.totalorder %s127, %s128
      %p139 = scmp.eq.s32.totalorder %s25, 0
      %p140 = por %p138, %p139
      %p141 = scmp.ne.s32.totalorder %s127, %s128
      %p142 = scmp.eq.s32.totalorder %s26, 1
      %p143 = por %p141, %p142
      %p145 = scmp.ne.s32.totalorder %s128, %s144
      %p146 = scmp.eq.s32.totalorder %s26, 0
      %p147 = por %p145, %p146
      %s148 = ssub.s32 %s20, %s27
      %p149 = scmp.eq.s32.totalorder %s148, 0
      %s151 = sadd.s32 %s150, 1
      %s152 = scalar_select %p149, %s150, %s151
      %p155 = pneg %p149
      %p156 = scmp.eq.s32.totalorder %s20, 1
      %p157 = por %p155, %p156
      %p158 = scmp.ne.s32.totalorder %s150, %s153
      %p159 = scmp.eq.s32.totalorder %s20, 0
      %p160 = por %p158, %p159
      %p161 = scmp.ne.s32.totalorder %s150, %s153
      %p162 = scmp.eq.s32.totalorder %s25, 1
      %p163 = por %p161, %p162
      %p164 = scmp.ne.s32.totalorder %s153, %s154
      %p165 = scmp.eq.s32.totalorder %s25, 0
      %p166 = por %p164, %p165
      %p167 = scmp.ne.s32.totalorder %s153, %s154
      %p168 = scmp.eq.s32.totalorder %s26, 1
      %p169 = por %p167, %p168
      %p171 = scmp.ne.s32.totalorder %s154, %s170
      %p172 = scmp.eq.s32.totalorder %s26, 0
      %p173 = por %p171, %p172
      %s175 = sadd.s32 %s174, 1
      %p178 = scmp.eq.s32.totalorder %s20, 1
      %p179 = scmp.ne.s32.totalorder %s174, %s176
      %p180 = scmp.eq.s32.totalorder %s20, 0
      %p181 = por %p179, %p180
      %p182 = scmp.ne.s32.totalorder %s174, %s176
      %p183 = scmp.eq.s32.totalorder %s25, 1
      %p184 = por %p182, %p183
      %p185 = scmp.ne.s32.totalorder %s176, %s177
      %p186 = scmp.eq.s32.totalorder %s25, 0
      %p187 = por %p185, %p186
      %p188 = scmp.ne.s32.totalorder %s176, %s177
      %p189 = scmp.eq.s32.totalorder %s26, 1
      %p190 = por %p188, %p189
      %p192 = scmp.ne.s32.totalorder %s177, %s191
      %p193 = scmp.eq.s32.totalorder %s26, 0
      %p194 = por %p192, %p193
      %s196 = sadd.s32 %s195, 1
      %p199 = scmp.eq.s32.totalorder %s20, 1
      %p200 = scmp.ne.s32.totalorder %s195, %s197
      %p201 = scmp.eq.s32.totalorder %s20, 0
      %p202 = por %p200, %p201
      %p203 = scmp.ne.s32.totalorder %s195, %s197
      %p204 = scmp.eq.s32.totalorder %s25, 1
      %p205 = por %p203, %p204
      %p206 = scmp.ne.s32.totalorder %s197, %s198
      %p207 = scmp.eq.s32.totalorder %s25, 0
      %p208 = por %p206, %p207
      %p209 = scmp.ne.s32.totalorder %s197, %s198
      %p210 = scmp.eq.s32.totalorder %s26, 1
      %p211 = por %p209, %p210
      %p213 = scmp.ne.s32.totalorder %s198, %s212
      %p214 = scmp.eq.s32.totalorder %s26, 0
      %p215 = por %p213, %p214
      %s217 = sadd.s32 %s216, 1
      %p220 = scmp.eq.s32.totalorder %s20, 1
      %p221 = scmp.ne.s32.totalorder %s216, %s218
      %p222 = scmp.eq.s32.totalorder %s20, 0
      %p223 = por %p221, %p222
      %p224 = scmp.ne.s32.totalorder %s216, %s218
      %p225 = scmp.eq.s32.totalorder %s25, 1
      %p226 = por %p224, %p225
      %p227 = scmp.ne.s32.totalorder %s218, %s219
      %p228 = scmp.eq.s32.totalorder %s25, 0
      %p229 = por %p227, %p228
      %p230 = scmp.ne.s32.totalorder %s218, %s219
      %p231 = scmp.eq.s32.totalorder %s26, 1
      %p232 = por %p230, %p231
      %p234 = scmp.ne.s32.totalorder %s219, %s233
      %p235 = scmp.eq.s32.totalorder %s26, 0
      %p236 = por %p234, %p235
      %p237 = scmp.le.s32.totalorder 1, %s20
      %p238 = scmp.lt.s32.totalorder %s20, 3
      %p239 = pnand %p237, %p238
      %p240 = pneg %p239
      // Predicated region
      $region9: #{tpu_custom_call.1} parent=5 // pred_check
        _
      $region10: #{tpu_custom_call.1} parent=5 // pred_check_branch
        %242 = sbr.rel (%p239) target = $region12
      $region11: #{tpu_custom_call.1} parent=5 // pred_region
        %s243 = ssub.s32 %s20, 1
        // Predicated region
        $region13: #{tpu_custom_call.1} parent=11 // pred_check
          %p244 = pneg %p41
        $region14: #{tpu_custom_call.1} parent=11 // pred_check_branch
          %246 = sbr.rel (%p244) target = $region16
        $region15: #{tpu_custom_call.1} parent=11 // pred_region
          %248 = vsyncadd [#allocation4], 0
          %s249 = sshll.u32 %s0, 4
          %s250 = int_to_ptr.hbm [resolvable:$true] %s249
          %s251 = sshll.u32 [#allocation3], 4
          %s252 = int_to_ptr.vmem [resolvable:$true] %s251
          %257 = dma.hbm_to_vmem [thread:$0]  %s250, 256, %s252, [#allocation4], 128, 128, 8
        $region16: #{tpu_custom_call.1} parent=11 // pred_fallthru
          _
        // Predicated region
        $region17: #{tpu_custom_call.1} parent=11 // pred_check
          %p258 = pneg %p62
        $region18: #{tpu_custom_call.1} parent=11 // pred_check_branch
          %260 = sbr.rel (%p258) target = $region20
        $region19: #{tpu_custom_call.1} parent=11 // pred_region
          %262 = vsyncadd [#allocation8], 0
          %s263 = sshll.u32 %s1, 4
          %s264 = int_to_ptr.hbm [resolvable:$true] %s263
          %s265 = sshll.u32 [#allocation7], 4
          %s266 = int_to_ptr.vmem [resolvable:$true] %s265
          %271 = dma.hbm_to_vmem [thread:$0]  %s264, 256, %s266, [#allocation8], 128, 128, 8
        $region20: #{tpu_custom_call.1} parent=11 // pred_fallthru
          _
        // Predicated region
        $region21: #{tpu_custom_call.1} parent=11 // pred_check
          %p272 = pneg %p187
        $region22: #{tpu_custom_call.1} parent=11 // pred_check_branch
          %274 = sbr.rel (%p272) target = $region24
        $region23: #{tpu_custom_call.1} parent=11 // pred_region
          %276 = vsyncadd [#allocation6], 0
          %s278 = sshll.u32 %s6, 4
          %s279 = int_to_ptr.hbm [resolvable:$true] %s278
          %281 = dma.hbm_to_smem %s279, 32, [#allocation11], [#allocation6]
        $region24: #{tpu_custom_call.1} parent=11 // pred_fallthru
          _
      $region12: #{tpu_custom_call.1} parent=5 // pred_fallthru
        _
      %p282 = scmp.lt.s32.totalorder %s20, 2
      // Predicated region
      $region25: #{tpu_custom_call.1} parent=5 // pred_check
        %p283 = pneg %p282
      $region26: #{tpu_custom_call.1} parent=5 // pred_check_branch
        %285 = sbr.rel (%p283) target = $region28
      $region27: #{tpu_custom_call.1} parent=5 // pred_region
        // Predicated region
        $region29: #{tpu_custom_call.1} parent=27 // pred_check
          %p286 = pneg %p82
        $region30: #{tpu_custom_call.1} parent=27 // pred_check_branch
          %288 = sbr.rel (%p286) target = $region32
        $region31: #{tpu_custom_call.1} parent=27 // pred_region
          %s289 = sand.u32 %s20, 1
          %s290 = scalar_lea.sflag [#allocation4], %s289
          %s291 = sand.u32 %s72, 1
          %s292 = smul.addr %s291, 128
          %s293 = scalar_lea.vmem [#allocation9], %s292
          %295 = vsyncadd %s290, 0
          %s296 = smul.addr %s20, 16
          %s297 = smul.addr %s296, 8
          %s298 = scalar_lea.hbm %s2, %s297
          %s299 = sshll.u32 %s298, 4
          %s300 = int_to_ptr.hbm [resolvable:$true] %s299
          %s301 = sshll.u32 %s293, 4
          %s302 = int_to_ptr.vmem [resolvable:$true] %s301
          %307 = dma.hbm_to_vmem [thread:$0]  %s300, 2048, %s302, %s290, 128, 128, 8
        $region32: #{tpu_custom_call.1} parent=27 // pred_fallthru
          _
        // Predicated region
        $region33: #{tpu_custom_call.1} parent=27 // pred_check
          %p308 = pneg %p108
        $region34: #{tpu_custom_call.1} parent=27 // pred_check_branch
          %310 = sbr.rel (%p308) target = $region36
        $region35: #{tpu_custom_call.1} parent=27 // pred_region
          %p311 = scmp.lt.s32.totalorder %s20, 1
          %s312 = scalar_select %p311, %s20, 1
          %s313 = scalar_lea.vmem %s3, %s312
        $region36: #{tpu_custom_call.1} parent=27 // pred_fallthru
          _
        // Predicated region
        $region37: #{tpu_custom_call.1} parent=27 // pred_check
          %p314 = pneg %p134
        $region38: #{tpu_custom_call.1} parent=27 // pred_check_branch
          %316 = sbr.rel (%p314) target = $region40
        $region39: #{tpu_custom_call.1} parent=27 // pred_region
          %s317 = sand.u32 %s20, 1
          %s318 = scalar_lea.sflag [#allocation4], %s317
          %s319 = sand.u32 %s124, 1
          %s320 = scalar_lea.vmem [#allocation10], %s319
          %322 = vsyncadd %s318, 0
          %s323 = scalar_lea.hbm %s4, %s20
          %s325 = sshll.u32 %s323, 4
          %s326 = int_to_ptr.hbm [resolvable:$true] %s325
          %s327 = sshll.u32 %s320, 4
          %s328 = int_to_ptr.vmem [resolvable:$true] %s327
          %330 = dma.hbm_to_vmem [thread:$0]  %s326, 16, %s328, %s318
        $region40: #{tpu_custom_call.1} parent=27 // pred_fallthru
          _
        // Predicated region
        $region41: #{tpu_custom_call.1} parent=27 // pred_check
          %p331 = pneg %p160
        $region42: #{tpu_custom_call.1} parent=27 // pred_check_branch
          %333 = sbr.rel (%p331) target = $region44
        $region43: #{tpu_custom_call.1} parent=27 // pred_region
          %p334 = scmp.lt.s32.totalorder %s20, 1
          %s335 = scalar_select %p334, %s20, 1
          %s336 = scalar_lea.vmem %s5, %s335
        $region44: #{tpu_custom_call.1} parent=27 // pred_fallthru
          _
      $region28: #{tpu_custom_call.1} parent=5 // pred_fallthru
        _
      %p337 = scmp.le.s32.totalorder 1, %s20
      %p338 = scmp.lt.s32.totalorder %s20, 3
      %p339 = pnand %p337, %p338
      %p340 = pneg %p339
      // Predicated region
      $region45: #{tpu_custom_call.1} parent=5 // pred_check
        _
      $region46: #{tpu_custom_call.1} parent=5 // pred_check_branch
        %342 = sbr.rel (%p339) target = $region48
      $region47: #{tpu_custom_call.1} parent=5 // pred_region
        %s343 = ssub.s32 %s20, 1
        // Predicated region
        $region49: #{tpu_custom_call.1} parent=47 // pred_check
          %p344 = pneg %p41
        $region50: #{tpu_custom_call.1} parent=47 // pred_check_branch
          %346 = sbr.rel (%p344) target = $region52
        $region51: #{tpu_custom_call.1} parent=47 // pred_region
          %348 = dma.done [#allocation4], 256
        $region52: #{tpu_custom_call.1} parent=47 // pred_fallthru
          _
        // Predicated region
        $region53: #{tpu_custom_call.1} parent=47 // pred_check
          %p349 = pneg %p62
        $region54: #{tpu_custom_call.1} parent=47 // pred_check_branch
          %351 = sbr.rel (%p349) target = $region56
        $region55: #{tpu_custom_call.1} parent=47 // pred_region
          %353 = dma.done [#allocation8], 256
        $region56: #{tpu_custom_call.1} parent=47 // pred_fallthru
          _
        %s354 = sand.u32 %s25, 1
        %s355 = scalar_lea.sflag [#allocation4], %s354
        %s356 = sand.u32 %s75, 1
        %s357 = smul.addr %s356, 128
        %s358 = scalar_lea.vmem [#allocation9], %s357
        // Predicated region
        $region57: #{tpu_custom_call.1} parent=47 // pred_check
          %p359 = pneg %p88
        $region58: #{tpu_custom_call.1} parent=47 // pred_check_branch
          %361 = sbr.rel (%p359) target = $region60
        $region59: #{tpu_custom_call.1} parent=47 // pred_region
          %363 = dma.done %s355, 2048
        $region60: #{tpu_custom_call.1} parent=47 // pred_fallthru
          _
        %s364 = sand.u32 %s25, 1
        %s365 = scalar_lea.sflag [#allocation4], %s364
        %s366 = sand.u32 %s127, 1
        %s367 = scalar_lea.vmem [#allocation10], %s366
        // Predicated region
        $region61: #{tpu_custom_call.1} parent=47 // pred_check
          %p368 = pneg %p140
        $region62: #{tpu_custom_call.1} parent=47 // pred_check_branch
          %370 = sbr.rel (%p368) target = $region64
        $region63: #{tpu_custom_call.1} parent=47 // pred_region
          %372 = dma.done %s365, 16
        $region64: #{tpu_custom_call.1} parent=47 // pred_fallthru
          _
        // Predicated region
        $region65: #{tpu_custom_call.1} parent=47 // pred_check
          %p373 = pneg %p187
        $region66: #{tpu_custom_call.1} parent=47 // pred_check_branch
          %375 = sbr.rel (%p373) target = $region68
        $region67: #{tpu_custom_call.1} parent=47 // pred_region
          %377 = dma.done [#allocation6], 32
        $region68: #{tpu_custom_call.1} parent=47 // pred_fallthru
          _
        %378 = sfence
        %p379 = pneg %p41
        %p380 = pneg %p38
        %p381 = pneg %p62
        %p382 = pneg %p59
        %s383 = sand.u32 %s25, 1
        %s384 = scalar_lea.sflag [#allocation4], %s383
        %s385 = sand.u32 %s75, 1
        %s386 = smul.addr %s385, 128
        %s387 = scalar_lea.vmem [#allocation9], %s386
        %p388 = pneg %p88
        %p389 = pneg %p85
        %p390 = scmp.lt.s32.totalorder %s25, 1
        %s391 = scalar_select %p390, %s25, 1
        %s392 = scalar_lea.vmem %s3, %s391
        %p393 = pneg %p114
        %p394 = pneg %p111
        %s395 = sand.u32 %s25, 1
        %s396 = scalar_lea.sflag [#allocation4], %s395
        %s397 = sand.u32 %s127, 1
        %s398 = scalar_lea.vmem [#allocation10], %s397
        %p399 = pneg %p140
        %p400 = pneg %p137
        %p401 = scmp.lt.s32.totalorder %s25, 1
        %s402 = scalar_select %p401, %s25, 1
        %s403 = scalar_lea.vmem %s5, %s402
        %p404 = pneg %p166
        %p405 = pneg %p163
        %p406 = pneg %p187
        %p407 = pneg %p184
        %p408 = pneg %p208
        %p409 = pneg %p205
        %p410 = pneg %p229
        %p411 = pneg %p226
        %p412 = scmp.lt.s32.totalorder %s25, 1
        %s413 = scalar_select %p412, %s25, 1
        %s414 = scalar_lea.vmem %s3, %s413
        %p415 = scmp.lt.s32.totalorder %s25, 1
        %s416 = scalar_select %p415, %s25, 1
        %s417 = scalar_lea.vmem %s5, %s416
        %p418 = scmp.eq.s32.totalorder %s25, 0
        // Predicated region
        $region69: #{tpu_custom_call.1} parent=47 // pred_check
          %p419 = pneg %p418
        $region70: #{tpu_custom_call.1} parent=47 // pred_check_branch
          %421 = sbr.rel (%p419) target = $region72
        $region71: #{tpu_custom_call.1} parent=47 // pred_region
          %v422 = vld [vmem:[#allocation7] sm:$0xff]
          %v423 = vld [vmem:[#allocation7 + $0x8] sm:$0xff]
          %424 = vst [vmem:[#allocation2] sm:$0xff] %v422
          %425 = vst [vmem:[#allocation2 + $0x8] sm:$0xff] %v423
          %426 = vst [vmem:[#allocation13] sm:$0x1] 0.0
        $region72: #{tpu_custom_call.1} parent=47 // pred_fallthru
          _
        %v427 = vld [vmem:[#allocation2] sm:$0xff]
        %v428 = vld [vmem:[#allocation2 + $0x8] sm:$0xff]
        %v429 = vld [vmem:[#allocation3] sm:$0xff]
        %v430 = vld [vmem:[#allocation3 + $0x8] sm:$0xff]
        %vm431 = vcmask 130048
        %v433 = vsel %vm431, %v429, 0
        %v436 = vsel %vm431, %v430, 0
        %438 = vmatpush.msra.mxu0 0.0
        %439 = vmatpush.msra.mxu0 0.0
        %440 = vmatpush.msra.mxu0 0.0
        %441 = vmatpush.msra.mxu0 0.0
        %442 = vmatpush.msra.mxu0 0.0
        %443 = vmatpush.msra.mxu0 0.0
        %444 = vmatpush.msra.mxu0 0.0
        %445 = vmatpush.msra.mxu0 0.0
        %446 = vmatpush.msra.mxu0 0.0
        %447 = vmatpush.msra.mxu0 0.0
        %448 = vmatpush.msra.mxu0 0.0
        %449 = vmatpush.msra.mxu0 0.0
        %450 = vmatpush.msra.mxu0 0.0
        %451 = vmatpush.msra.mxu0 0.0
        %452 = vmatpush.msra.mxu0 %v428
        %453 = vmatpush.msra.mxu0 %v427
        %454 = vmatmul.f32.gmra.mxu0 %v433
        %v455 = vpop.f32.mrf.mxu0
        %v456 = vadd.f32 0.0, %v455
        %457 = vmatmul.f32.gmra.mxu0 %v436
        %v458 = vpop.f32.mrf.mxu0
        %v459 = vadd.f32 0.0, %v458
        %460 = vdwg.mxu0
        %v461 = vld [vmem:[%s358] sm:$0xff]
        %v462 = vld [vmem:[%s358 + $0x8] sm:$0xff]
        %v463 = vld [vmem:[%s358 + $0x10] sm:$0xff]
        %v464 = vld [vmem:[%s358 + $0x18] sm:$0xff]
        %v465 = vld [vmem:[%s358 + $0x20] sm:$0xff]
        %v466 = vld [vmem:[%s358 + $0x28] sm:$0xff]
        %v467 = vld [vmem:[%s358 + $0x30] sm:$0xff]
        %v468 = vld [vmem:[%s358 + $0x38] sm:$0xff]
        %v469 = vld [vmem:[%s358 + $0x40] sm:$0xff]
        %v470 = vld [vmem:[%s358 + $0x48] sm:$0xff]
        %v471 = vld [vmem:[%s358 + $0x50] sm:$0xff]
        %v472 = vld [vmem:[%s358 + $0x58] sm:$0xff]
        %v473 = vld [vmem:[%s358 + $0x60] sm:$0xff]
        %v474 = vld [vmem:[%s358 + $0x68] sm:$0xff]
        %v475 = vld [vmem:[%s358 + $0x70] sm:$0xff]
        %v476 = vld [vmem:[%s358 + $0x78] sm:$0xff]
        %v477 = vld [vmem:[%s414] sm:$0x1]
        %v479 = vperm.slane %v477, 0
        %481 = vmatpush.msra.mxu0 %v476
        %482 = vmatpush.msra.mxu0 %v475
        %483 = vmatpush.msra.mxu0 %v474
        %484 = vmatpush.msra.mxu0 %v473
        %485 = vmatpush.msra.mxu0 %v472
        %486 = vmatpush.msra.mxu0 %v471
        %487 = vmatpush.msra.mxu0 %v470
        %488 = vmatpush.msra.mxu0 %v469
        %489 = vmatpush.msra.mxu0 %v468
        %490 = vmatpush.msra.mxu0 %v467
        %491 = vmatpush.msra.mxu0 %v466
        %492 = vmatpush.msra.mxu0 %v465
        %493 = vmatpush.msra.mxu0 %v464
        %494 = vmatpush.msra.mxu0 %v463
        %495 = vmatpush.msra.mxu0 %v462
        %496 = vmatpush.msra.mxu0 %v461
        %497 = vmatmul.f32.gmra.mxu0 %v456
        %v498 = vpop.f32.mrf.mxu0
        %v499 = vadd.f32 %v479, %v498
        %500 = vmatmul.f32.gmra.mxu0 %v459
        %v501 = vpop.f32.mrf.mxu0
        %v502 = vadd.f32 %v479, %v501
        %503 = vdwg.mxu0
        %s504 = smul.u32 %s25, 128
        %s505 = sld [smem:[#allocation11 + %s504]]
        %vm506 = vcmp.ge.f32.partialorder %v499, 0.0
        %vm507 = vcmp.ge.f32.partialorder %v502, 0.0
        %v508 = vstv %s505
        %v509 = vmul.f32 %v508, %v499
        %v510 = vmul.f32 %v508, %v502
        %v511 = vsel %vm506, %v499, %v509
        %v512 = vsel %vm507, %v502, %v510
        %v513 = vadd.f32 %v511, %v512
        %v514 = vrot.slane %v513, 4
        %v515 = vadd.f32 %v513, %v514
        %v516 = vrot.slane %v515, 2
        %v517 = vadd.f32 %v515, %v516
        %v518 = vrot.slane %v517, 1
        %v519 = vadd.f32 %v517, %v518
        %v520 = vmul.f32 %v511, %v511
        %v521 = vmul.f32 %v512, %v512
        %v522 = vadd.f32 %v520, %v521
        %v523 = vrot.slane %v522, 4
        %v524 = vadd.f32 %v522, %v523
        %v525 = vrot.slane %v524, 2
        %v526 = vadd.f32 %v524, %v525
        %v527 = vrot.slane %v526, 1
        %v528 = vadd.f32 %v526, %v527
        %v529 = vmul.f32 %v519, 0.0625
        %v530 = vmul.f32 %v528, 0.0625
        %v531 = vmul.f32 %v529, %v529
        %v532 = vsub.f32 %v530, %v531
        %v533 = vmax.f32 %v532, 0.0
        %v534 = vsub.f32 %v511, %v529
        %v535 = vsub.f32 %v512, %v529
        %v536 = vadd.f32 %v533, 1e-05
        %v537 = vrsqrt.pop %v536
        %v538 = vmul.f32 %v537, %v536
        %v539 = vmul.f32 %v538, %v537
        %v540 = vmul.f32 0.5, %v539
        %v541 = vsub.f32 1.5, %v540
        %v542 = vmul.f32 %v537, %v541
        %vm543 = vweird.f32 %v536
        %vm544 = vweird.f32 %v537
        %vm545 = vmor %vm543, %vm544
        %v546 = vsel %vm545, %v537, %v542
        %v547 = vmul.f32 %v534, %v546
        %v548 = vmul.f32 %v535, %v546
        %v549 = vld [vmem:[%s367] sm:$0x1]
        %v551 = vperm.slane %v549, 0
        %v553 = vmul.f32 %v547, %v551
        %v554 = vmul.f32 %v548, %v551
        %v555 = vld [vmem:[%s417] sm:$0x1]
        %v557 = vperm.slane %v555, 0
        %v559 = vadd.f32 %v553, %v557
        %v560 = vadd.f32 %v554, %v557
        %s561 = sadd.s32 %s504, 1
        %s562 = sld [smem:[#allocation11 + %s561]]
        %vm563 = vcmp.ge.f32.partialorder %v559, 0.0
        %vm564 = vcmp.ge.f32.partialorder %v560, 0.0
        %v565 = vstv %s562
        %v566 = vmul.f32 %v565, %v559
        %v567 = vmul.f32 %v565, %v560
        %v568 = vsel %vm563, %v559, %v566
        %v569 = vsel %vm564, %v560, %v567
        %570 = vst [vmem:[#allocation2] sm:$0xff] %v568
        %571 = vst [vmem:[#allocation2 + $0x8] sm:$0xff] %v569
        %v572 = vld [vmem:[#allocation13] sm:$0x1]
        %v573 = vadd.f32 %v568, %v569
        %v574 = vrot.slane %v573, 4
        %v575 = vadd.f32 %v573, %v574
        %v576 = vrot.slane %v575, 2
        %v577 = vadd.f32 %v575, %v576
        %v578 = vrot.slane %v577, 1
        %v579 = vadd.f32 %v577, %v578
        %v580 = vadd.f32 %v572, %v579
        %581 = vst [vmem:[#allocation13] sm:$0x1] %v580
        %p582 = scmp.eq.s32.totalorder %s25, 1
        // Predicated region
        $region73: #{tpu_custom_call.1} parent=47 // pred_check
          %p583 = pneg %p582
        $region74: #{tpu_custom_call.1} parent=47 // pred_check_branch
          %585 = sbr.rel (%p583) target = $region76
        $region75: #{tpu_custom_call.1} parent=47 // pred_region
          %586 = vst [vmem:[#allocation12] sm:$0xff] %v568
          %587 = vst [vmem:[#allocation12 + $0x8] sm:$0xff] %v569
        $region76: #{tpu_custom_call.1} parent=47 // pred_fallthru
          _
        // Predicated region
        $region77: #{tpu_custom_call.1} parent=47 // pred_check
          %p588 = pneg %p205
        $region78: #{tpu_custom_call.1} parent=47 // pred_check_branch
          %590 = sbr.rel (%p588) target = $region80
        $region79: #{tpu_custom_call.1} parent=47 // pred_region
          %592 = vsyncadd [#allocation5], 0
          %s593 = sshll.u32 [#allocation12], 4
          %s594 = int_to_ptr.vmem [resolvable:$true] %s593
          %s595 = sshll.u32 %s7, 4
          %s596 = int_to_ptr.hbm [resolvable:$true] %s595
          %601 = dma.vmem_to_hbm [thread:$0]  %s594, 256, %s596, [#allocation5], 128, 128, 8
        $region80: #{tpu_custom_call.1} parent=47 // pred_fallthru
          _
        // Predicated region
        $region81: #{tpu_custom_call.1} parent=47 // pred_check
          %p602 = pneg %p226
        $region82: #{tpu_custom_call.1} parent=47 // pred_check_branch
          %604 = sbr.rel (%p602) target = $region84
        $region83: #{tpu_custom_call.1} parent=47 // pred_region
          %606 = vsyncadd [#allocation14], 0
          %s608 = sshll.u32 [#allocation13], 4
          %s609 = int_to_ptr.vmem [resolvable:$true] %s608
          %s610 = sshll.u32 %s8, 4
          %s611 = int_to_ptr.hbm [resolvable:$true] %s610
          %613 = dma.vmem_to_hbm [thread:$0]  %s609, 16, %s611, [#allocation14]
        $region84: #{tpu_custom_call.1} parent=47 // pred_fallthru
          _
        // Predicated region
        $region85: #{tpu_custom_call.1} parent=47 // pred_check
          %p614 = pneg %p205
        $region86: #{tpu_custom_call.1} parent=47 // pred_check_branch
          %616 = sbr.rel (%p614) target = $region88
        $region87: #{tpu_custom_call.1} parent=47 // pred_region
          %618 = dma.done [#allocation5], 256
        $region88: #{tpu_custom_call.1} parent=47 // pred_fallthru
          _
        // Predicated region
        $region89: #{tpu_custom_call.1} parent=47 // pred_check
          %p619 = pneg %p226
        $region90: #{tpu_custom_call.1} parent=47 // pred_check_branch
          %621 = sbr.rel (%p619) target = $region92
        $region91: #{tpu_custom_call.1} parent=47 // pred_region
          %623 = dma.done [#allocation14], 16
        $region92: #{tpu_custom_call.1} parent=47 // pred_fallthru
          _
      $region48: #{tpu_custom_call.1} parent=5 // pred_fallthru
        _
      %p624 = scmp.le.s32.totalorder 2, %s20
      // Predicated region
      $region93: #{tpu_custom_call.1} parent=5 // pred_check
        %p625 = pneg %p624
      $region94: #{tpu_custom_call.1} parent=5 // pred_check_branch
        %627 = sbr.rel (%p625) target = $region96
      $region95: #{tpu_custom_call.1} parent=5 // pred_region
        %s628 = ssub.s32 %s20, 2
      $region96: #{tpu_custom_call.1} parent=5 // pred_fallthru
        _
    $region6: #{tpu_custom_call.1} parent=1 // loop_footer
      %s24 = sadd.s32 1, %s20
    $region7: #{tpu_custom_call.1} parent=1 // loop_footer_branch
      %19 = sbr.rel target = $region3
    $region8: #{tpu_custom_call.1} parent=1 // loop_exit
      _
    %629 = vsyncpa [#allocation4], 1
    %s630 = scalar_lea.sflag [#allocation4], 1
    %631 = vsyncpa %s630, 1
    %632 = vsyncpa [#allocation8], 1
    %633 = vsyncpa [#allocation5], 1
    %s634 = scalar_lea.sflag [#allocation5], 1
    %635 = vsyncpa %s634, 1
    %636 = vsyncpa [#allocation14], 1
    %637 = vsyncpa [#allocation6], 1
    %s638 = scalar_lea.sflag [#allocation6], 1
    %639 = vsyncpa %s638, 1

</llo_original>
